<compile_context>
chip_gen: v6e
topology: v6e:2x2x1
jax: 0.10.0
libtpu: 0.0.40
codegen_flags: <defaults>
</compile_context>

<pallas_src>
import math

import jax
import jax.numpy as jnp
from jax.experimental import pallas as pl
from jax.experimental.pallas import tpu as pltpu


def _round_up(x, m):
    return ((x + m - 1) // m) * m


def _vmem_capacity_bytes():
    try:
        return int(pltpu.get_tpu_info().vmem_capacity_bytes)
    except Exception:
        return 128 << 20  # assume a 128 MiB chip (v5e/v6e) if the query fails


def _choose_ti(I, ti_budget):
    """Largest I-tile <= ti_budget that divides I and is a multiple of 128
    (falls back to the full I when I is not tileable)."""
    if I <= ti_budget:
        return I
    if I % 128 != 0:
        # TODO(synk): non-128-multiple intermediate dims bigger than the VMEM
        # budget would need padding of I; realistic LLaMA shapes never hit this.
        return I
    c = max(128, (ti_budget // 128) * 128)
    while c >= 128:
        if I % c == 0:
            return c
        c -= 128
    return 128  # 128 always divides I here


def _ffn_partial(x_ref, w1_ref, w3_ref, w2_ref):
    """SwiGLU partial product for one (row tile, I tile): (tm, H) f32."""
    x = x_ref[...]                                           # native dtype (MXU)
    h1 = jnp.dot(x, w1_ref[...], preferred_element_type=jnp.float32)
    h3 = jnp.dot(x, w3_ref[...], preferred_element_type=jnp.float32)
    gated = (h1 * jax.nn.sigmoid(h1)) * h3                   # f32 gate math (VPU/EUP)
    return jnp.dot(gated.astype(w2_ref.dtype), w2_ref[...],
                   preferred_element_type=jnp.float32)


def _ffn_kernel_single(x_ref, w1_ref, w3_ref, w2_ref, o_ref):
    """nI == 1: no accumulator scratch, write output directly."""
    o_ref[...] = _ffn_partial(x_ref, w1_ref, w3_ref, w2_ref).astype(o_ref.dtype)


def _ffn_kernel_acc(x_ref, w1_ref, w3_ref, w2_ref, o_ref, acc_ref):
    """nI > 1: accumulate partials over the I grid axis (last, 'arbitrary')."""
    k = pl.program_id(1)
    nk = pl.num_programs(1)
    partial = _ffn_partial(x_ref, w1_ref, w3_ref, w2_ref)

    @pl.when(k == 0)
    def _():
        acc_ref[...] = partial                    # overwrite: no zero-init pass

    @pl.when(jnp.logical_and(k > 0, k < nk - 1))
    def _():
        acc_ref[...] += partial

    @pl.when(k == nk - 1)
    def _():
        # fold the last partial directly into the output store
        o_ref[...] = (acc_ref[...] + partial).astype(o_ref.dtype)


def feed_forward(x, w1_t, w3_t, w2_t, *, tm=None, ti=None):
    """x: (M, H); w1_t/w3_t: (H, I); w2_t: (I, H). Returns (M, H)."""
    M, H = x.shape
    I = w1_t.shape[1]
    dtype = x.dtype
    bpe = jnp.dtype(dtype).itemsize
    sublane = 32 // bpe                       # 8 for f32, 16 for bf16

    vmem_cap = _vmem_capacity_bytes()
    vmem_budget = int(0.7 * vmem_cap)

    # --- token (row) tile --------------------------------------------------
    if tm is None:
        # 128 MiB chips (v5e/v6e) can afford bigger row tiles; v7x (64 MiB)
        # crosses its compute-bound threshold already at tm ~ 384.
        tm = 512 if vmem_cap >= (96 << 20) else 384
    tm = max(sublane, min(tm, _round_up(M, sublane)))
    tm = _round_up(tm, sublane)
    # keep the tm-proportional footprint (x/out double-buffered, acc, partial)
    # within ~60% of the budget so weights still fit
    while tm > sublane and (4 * tm * H * bpe + 8 * tm * H) > 0.6 * vmem_budget:
        tm = max(sublane, _round_up(tm // 2, sublane))
    M_pad = _round_up(M, tm)
    n_row_tiles = M_pad // tm

    # --- I tile from the remaining VMEM budget ------------------------------
    if ti is None:
        fixed = 4 * tm * H * bpe + 8 * tm * H        # x,out (2x buf) + acc + partial (f32)
        per_ti = 6 * H * bpe + 12 * tm               # w1,w3,w2 (2x buf) + h1,h3,gated (f32)
        ti_budget = max(128, (vmem_budget - fixed) // per_ti)
        ti = _choose_ti(I, ti_budget)
    assert ti == I or (ti % 128 == 0 and I % ti == 0), (
        "I tile must be a multiple of 128 dividing I, or the full I")
    nI = I // ti

    # --- pad tokens to a whole number of row tiles ---------------------------
    x_p = x if M_pad == M else jnp.pad(x, ((0, M_pad - M), (0, 0)))

    # --- VMEM budget / limit --------------------------------------------------
    vmem_need = (2 * bpe * (2 * tm * H + 3 * H * ti)   # double-buffered x,out,w1,w3,w2
                 + tm * H * 4                          # f32 accumulator scratch
                 + tm * H * 4                          # f32 partial
                 + 3 * tm * ti * 4)                    # f32 h1, h3, gated temps
    vmem_limit = min(max(int(vmem_need * 1.25) + (4 << 20), 32 << 20),
                     int(0.85 * vmem_cap))             # never exceed physical VMEM

    cost = pl.CostEstimate(
        flops=6 * M_pad * H * I,
        transcendentals=M_pad * I,
        # weights are re-streamed once per row tile
        bytes_accessed=n_row_tiles * 3 * H * I * bpe + 2 * M_pad * H * bpe,
    )

    if nI == 1:
        grid_spec = pltpu.PrefetchScalarGridSpec(
            num_scalar_prefetch=0,
            grid=(n_row_tiles,),
            in_specs=[
                pl.BlockSpec((tm, H), lambda i: (i, 0)),   # x row tile
                pl.BlockSpec((H, I), lambda i: (0, 0)),    # w1 (full)
                pl.BlockSpec((H, I), lambda i: (0, 0)),    # w3 (full)
                pl.BlockSpec((I, H), lambda i: (0, 0)),    # w2 (full)
            ],
            out_specs=pl.BlockSpec((tm, H), lambda i: (i, 0)),
        )
        kernel = _ffn_kernel_single
        dims = ("parallel",)
    else:
        grid_spec = pltpu.PrefetchScalarGridSpec(
            num_scalar_prefetch=0,
            grid=(n_row_tiles, nI),                        # reduction axis last
            in_specs=[
                pl.BlockSpec((tm, H), lambda i, k: (i, 0)),   # x row tile
                pl.BlockSpec((H, ti), lambda i, k: (0, k)),   # w1 I-tile
                pl.BlockSpec((H, ti), lambda i, k: (0, k)),   # w3 I-tile
                pl.BlockSpec((ti, H), lambda i, k: (k, 0)),   # w2 I-tile
            ],
            out_specs=pl.BlockSpec((tm, H), lambda i, k: (i, 0)),
            scratch_shapes=[pltpu.VMEM((tm, H), jnp.float32)],
        )
        kernel = _ffn_kernel_acc
        dims = ("parallel", "arbitrary")

    out = pl.pallas_call(
        kernel,
        out_shape=jax.ShapeDtypeStruct((M_pad, H), dtype),
        grid_spec=grid_spec,
        compiler_params=pltpu.CompilerParams(
            dimension_semantics=dims,
            vmem_limit_bytes=vmem_limit,
        ),
        cost_estimate=cost,
    )(x_p, w1_t, w3_t, w2_t)

    return out if M_pad == M else out[:M]


def feed_forward_ref(x, w1_t, w3_t, w2_t):
    h1 = x @ w1_t
    h3 = x @ w3_t
    return ((h1 * jax.nn.sigmoid(h1)) * h3) @ w2_t


if __name__ == "__main__":
    key = jax.random.PRNGKey(0)

    def init_weights(k, hidden, inter):
        k1, k2, k3 = jax.random.split(k, 3)
        b1 = 1.0 / math.sqrt(hidden)
        b2 = 1.0 / math.sqrt(inter)
        # PyTorch nn.Linear stores (out, in); we keep the transposed (in, out)
        # layout so every kernel matmul is a plain x @ W.
        w1_t = jax.random.uniform(k1, (hidden, inter), jnp.float32, -b1, b1)
        w3_t = jax.random.uniform(k3, (hidden, inter), jnp.float32, -b1, b1)
        w2_t = jax.random.uniform(k2, (inter, hidden), jnp.float32, -b2, b2)
        return w1_t, w3_t, w2_t

    # --- case 1: batch=2, seq=8, hidden=32, inter=64 (single-I-tile path) ----
    batch, seq, hidden, inter = 2, 8, 32, 64
    kx, kw, key = jax.random.split(key, 3)
    x = jax.random.normal(kx, (batch, seq, hidden), dtype=jnp.float32)
    w1_t, w3_t, w2_t = init_weights(kw, hidden, inter)

    x2d = x.reshape(batch * seq, hidden)          # flatten tokens (glue, plain JAX)
    out2d = feed_forward(x2d, w1_t, w3_t, w2_t)
    out = out2d.reshape(batch, seq, hidden)
    jax.block_until_ready(out)

    ref = feed_forward_ref(x2d, w1_t, w3_t, w2_t).reshape(batch, seq, hidden)
    assert out.shape == (batch, seq, hidden)
    assert jnp.allclose(out, ref, atol=1e-5, rtol=1e-5), "mismatch vs reference (case 1)"

    # --- case 2: exercise the I-tiled accumulator path (inter=256, ti=128) ---
    hidden2, inter2 = 32, 256
    kx2, kw2, key = jax.random.split(key, 3)
    xb = jax.random.normal(kx2, (batch * seq, hidden2), dtype=jnp.float32)
    w1b, w3b, w2b = init_weights(kw2, hidden2, inter2)
    outb = feed_forward(xb, w1b, w3b, w2b, ti=128)
    jax.block_until_ready(outb)
    refb = feed_forward_ref(xb, w1b, w3b, w2b)
    assert jnp.allclose(outb, refb, atol=1e-5, rtol=1e-5), "mismatch vs reference (case 2)"

    print("KERNEL_OK")
</pallas_src>

<mosaic_0001>
module attributes {stable_mosaic.version = 11 : i64} {
  func.func @_ffn_kernel_single(%arg0: i32, %arg1: memref<16x32xf32, #tpu.memory_space<vmem>>, %arg2: memref<32x64xf32, #tpu.memory_space<vmem>>, %arg3: memref<32x64xf32, #tpu.memory_space<vmem>>, %arg4: memref<64x32xf32, #tpu.memory_space<vmem>>, %arg5: memref<16x32xf32, #tpu.memory_space<vmem>>) attributes {dimension_semantics = [#tpu.dimension_semantics<parallel>], iteration_bounds = array<i64: 1>, scalar_prefetch = 0 : i64, scratch_operands = 0 : i64, tpu.core_type = #tpu.core_type<tc>, window_params = [{transform_indices = @transform_0, window_bounds = array<i64: 16, 32>}, {pipeline_mode = #tpu.pipeline_mode<synchronous>, transform_indices = @transform_1, window_bounds = array<i64: 32, 64>}, {pipeline_mode = #tpu.pipeline_mode<synchronous>, transform_indices = @transform_2, window_bounds = array<i64: 32, 64>}, {pipeline_mode = #tpu.pipeline_mode<synchronous>, transform_indices = @transform_3, window_bounds = array<i64: 64, 32>}, {transform_indices = @transform_4, window_bounds = array<i64: 16, 32>}]} {
    %c0 = arith.constant 0 : index
    %c0_0 = arith.constant 0 : index
    %0 = vector.load %arg1[%c0, %c0_0] : memref<16x32xf32, #tpu.memory_space<vmem>>, vector<16x32xf32>
    %c0_1 = arith.constant 0 : index
    %c0_2 = arith.constant 0 : index
    %1 = vector.load %arg2[%c0_1, %c0_2] : memref<32x64xf32, #tpu.memory_space<vmem>>, vector<32x64xf32>
    %cst = arith.constant dense<0.000000e+00> : vector<16x64xf32>
    %2 = tpu.matmul %0, %1, %cst {dimension_numbers = #tpu.dot_dimension_numbers<[1], [0], [0], [1], [0, 0, 1, 1], [], []>} : vector<16x32xf32>, vector<32x64xf32>, vector<16x64xf32> -> vector<16x64xf32>
    %c0_3 = arith.constant 0 : index
    %c0_4 = arith.constant 0 : index
    %3 = vector.load %arg3[%c0_3, %c0_4] : memref<32x64xf32, #tpu.memory_space<vmem>>, vector<32x64xf32>
    %cst_5 = arith.constant dense<0.000000e+00> : vector<16x64xf32>
    %4 = tpu.matmul %0, %3, %cst_5 {dimension_numbers = #tpu.dot_dimension_numbers<[1], [0], [0], [1], [0, 0, 1, 1], [], []>} : vector<16x32xf32>, vector<32x64xf32>, vector<16x64xf32> -> vector<16x64xf32>
    %5 = arith.negf %2 : vector<16x64xf32>
    %6 = math.exp %5 : vector<16x64xf32>
    %cst_6 = arith.constant 1.000000e+00 : f32
    %7 = vector.broadcast %cst_6 : f32 to vector<16x64xf32>
    %8 = arith.addf %7, %6 : vector<16x64xf32>
    %9 = arith.divf %7, %8 : vector<16x64xf32>
    %10 = arith.mulf %2, %9 : vector<16x64xf32>
    %11 = arith.mulf %10, %4 : vector<16x64xf32>
    %c0_7 = arith.constant 0 : index
    %c0_8 = arith.constant 0 : index
    %12 = vector.load %arg4[%c0_7, %c0_8] : memref<64x32xf32, #tpu.memory_space<vmem>>, vector<64x32xf32>
    %cst_9 = arith.constant dense<0.000000e+00> : vector<16x32xf32>
    %13 = tpu.matmul %11, %12, %cst_9 {dimension_numbers = #tpu.dot_dimension_numbers<[1], [0], [0], [1], [0, 0, 1, 1], [], []>} : vector<16x64xf32>, vector<64x32xf32>, vector<16x32xf32> -> vector<16x32xf32>
    %c0_10 = arith.constant 0 : index
    %c0_11 = arith.constant 0 : index
    %14 = vector.load %arg5[%c0_10, %c0_11] : memref<16x32xf32, #tpu.memory_space<vmem>>, vector<16x32xf32>
    tpu.vector_store %arg5[%c0_10, %c0_11], %13 {strides = array<i32>} : memref<16x32xf32, #tpu.memory_space<vmem>>, vector<16x32xf32>,
    return
  }
  func.func @transform_0(%arg0: i32) -> (i32, i32) {
    %c0_i32 = arith.constant 0 : i32
    %c0_i32_0 = arith.constant 0 : i32
    return %arg0, %c0_i32 : i32, i32
  }
  func.func @transform_1(%arg0: i32) -> (i32, i32) {
    %c0_i32 = arith.constant 0 : i32
    %c0_i32_0 = arith.constant 0 : i32
    %c0_i32_1 = arith.constant 0 : i32
    return %c0_i32, %c0_i32_0 : i32, i32
  }
  func.func @transform_2(%arg0: i32) -> (i32, i32) {
    %c0_i32 = arith.constant 0 : i32
    %c0_i32_0 = arith.constant 0 : i32
    %c0_i32_1 = arith.constant 0 : i32
    return %c0_i32, %c0_i32_0 : i32, i32
  }
  func.func @transform_3(%arg0: i32) -> (i32, i32) {
    %c0_i32 = arith.constant 0 : i32
    %c0_i32_0 = arith.constant 0 : i32
    %c0_i32_1 = arith.constant 0 : i32
    return %c0_i32, %c0_i32_0 : i32, i32
  }
  func.func @transform_4(%arg0: i32) -> (i32, i32) {
    %c0_i32 = arith.constant 0 : i32
    %c0_i32_0 = arith.constant 0 : i32
    return %arg0, %c0_i32 : i32, i32
  }
}

</mosaic_0001>

<llo_original>
// kernel: tpu_custom_call.1
$region0: #{tpu_custom_call.1}
  #allocation0 [shape = 'u32[]', space=smem, size = 0x4, offset = 0x4, fixed_abs, tag = 'smem constant byte address 0x4 - core index']
  #allocation1 [shape = 'u32[144,128]{1,0:T(1,128)}', space=vmem, size = 0x12000, scoped, tag = 'internal scratch']
  %s0 = inlined_call_operand.vmem [shape: f32[16,32], index: 0, kind: input, shape index: {}]
  %s1 = inlined_call_operand.vmem [shape: f32[32,64], index: 1, kind: input, shape index: {}]
  %s2 = inlined_call_operand.vmem [shape: f32[32,64], index: 2, kind: input, shape index: {}]
  %s3 = inlined_call_operand.vmem [shape: f32[64,32], index: 3, kind: input, shape index: {}]
  %s4 = inlined_call_operand.hbm [shape: f32[16,32], index: 4, kind: output, shape index: {}]
  %s5 = sld [smem:[#allocation0]]
  $region26: #{tpu_custom_call.1} parent=0
    _
  %s7 = ssub.s32 1, %s5
  %s8 = scalar_select 0, %s7, %s5
  $region1: #{tpu_custom_call.1} parent=0
    #allocation2 [shape = 'u8[8192]{0}', space=vmem, size = 0x2000, scoped, tag = 'output window, operand 0, single buffered']
    #allocation3 [shape = 's32[1]{0}', space=sflag, size = 0x4, scoped, tag = 'scoped memory for tpu_custom_call.1']
    %9 = vsyncpa [#allocation3], 0
    // Predicated region
    $region2: #{tpu_custom_call.1} parent=1 // pred_check
      _
    $region3: #{tpu_custom_call.1} parent=1 // pred_check_branch
      %11 = sbr.rel (0) target = $region5
    $region4: #{tpu_custom_call.1} parent=1 // pred_region
      _
    $region5: #{tpu_custom_call.1} parent=1 // pred_fallthru
      _
    // Predicated region
    $region6: #{tpu_custom_call.1} parent=1 // pred_check
      _
    $region7: #{tpu_custom_call.1} parent=1 // pred_check_branch
      %13 = sbr.rel (0) target = $region9
    $region8: #{tpu_custom_call.1} parent=1 // pred_region
      _
    $region9: #{tpu_custom_call.1} parent=1 // pred_fallthru
      _
    // Predicated region
    $region10: #{tpu_custom_call.1} parent=1 // pred_check
      _
    $region11: #{tpu_custom_call.1} parent=1 // pred_check_branch
      %15 = sbr.rel (0) target = $region13
    $region12: #{tpu_custom_call.1} parent=1 // pred_region
      _
    $region13: #{tpu_custom_call.1} parent=1 // pred_fallthru
      _
    // Predicated region
    $region14: #{tpu_custom_call.1} parent=1 // pred_check
      _
    $region15: #{tpu_custom_call.1} parent=1 // pred_check_branch
      %17 = sbr.rel (0) target = $region17
    $region16: #{tpu_custom_call.1} parent=1 // pred_region
      _
    $region17: #{tpu_custom_call.1} parent=1 // pred_fallthru
      _
    %v18 = vld [vmem:[%s0] sm:$0xff]
    %v19 = vld [vmem:[%s0 + $0x8] sm:$0xff]
    %v20 = vld [vmem:[%s1] sm:$0xff]
    %v21 = vld [vmem:[%s1 + $0x8] sm:$0xff]
    %v22 = vld [vmem:[%s1 + $0x10] sm:$0xff]
    %v23 = vld [vmem:[%s1 + $0x18] sm:$0xff]
    %vm24 = vcmask 261120
    %v26 = vsel %vm24, %v18, 0
    %v29 = vsel %vm24, %v19, 0
    %31 = vmatprep.subr.mxu0 0.0
    %32 = vmatpush1.msra.mxu0 0.0
    %33 = vmatprep.subr.mxu0 0.0
    %34 = vmatpush1.msra.mxu0 0.0
    %35 = vmatprep.subr.mxu0 0.0
    %36 = vmatpush1.msra.mxu0 0.0
    %37 = vmatprep.subr.mxu0 0.0
    %38 = vmatpush1.msra.mxu0 0.0
    %39 = vmatprep.subr.mxu0 0.0
    %40 = vmatpush1.msra.mxu0 0.0
    %41 = vmatprep.subr.mxu0 0.0
    %42 = vmatpush1.msra.mxu0 0.0
    %43 = vmatprep.subr.mxu0 0.0
    %44 = vmatpush1.msra.mxu0 0.0
    %45 = vmatprep.subr.mxu0 0.0
    %46 = vmatpush1.msra.mxu0 0.0
    %47 = vmatprep.subr.mxu0 0.0
    %48 = vmatpush1.msra.mxu0 0.0
    %49 = vmatprep.subr.mxu0 0.0
    %50 = vmatpush1.msra.mxu0 0.0
    %51 = vmatprep.subr.mxu0 0.0
    %52 = vmatpush1.msra.mxu0 0.0
    %53 = vmatprep.subr.mxu0 0.0
    %54 = vmatpush1.msra.mxu0 0.0
    %55 = vmatprep.subr.mxu0 0.0
    %56 = vmatpush1.msra.mxu0 %v23
    %57 = vmatprep.subr.mxu0 0.0
    %58 = vmatpush1.msra.mxu0 %v22
    %59 = vmatprep.subr.mxu0 0.0
    %60 = vmatpush1.msra.mxu0 %v21
    %61 = vmatprep.subr.mxu0 0.0
    %62 = vmatpush1.msra.mxu0 %v20
    %63 = vmatprep.subr.mxu0 0.0
    %64 = vmatpush2.msra.mxu0 0.0
    %65 = vmatprep.subr.mxu0 0.0
    %66 = vmatpush2.msra.mxu0 0.0
    %67 = vmatprep.subr.mxu0 0.0
    %68 = vmatpush2.msra.mxu0 0.0
    %69 = vmatprep.subr.mxu0 0.0
    %70 = vmatpush2.msra.mxu0 0.0
    %71 = vmatprep.subr.mxu0 0.0
    %72 = vmatpush2.msra.mxu0 0.0
    %73 = vmatprep.subr.mxu0 0.0
    %74 = vmatpush2.msra.mxu0 0.0
    %75 = vmatprep.subr.mxu0 0.0
    %76 = vmatpush2.msra.mxu0 0.0
    %77 = vmatprep.subr.mxu0 0.0
    %78 = vmatpush2.msra.mxu0 0.0
    %79 = vmatprep.subr.mxu0 0.0
    %80 = vmatpush2.msra.mxu0 0.0
    %81 = vmatprep.subr.mxu0 0.0
    %82 = vmatpush2.msra.mxu0 0.0
    %83 = vmatprep.subr.mxu0 0.0
    %84 = vmatpush2.msra.mxu0 0.0
    %85 = vmatprep.subr.mxu0 0.0
    %86 = vmatpush2.msra.mxu0 0.0
    %87 = vmatprep.subr.mxu0 0.0
    %88 = vmatpush2.msra.mxu0 0.0
    %89 = vmatprep.subr.mxu0 0.0
    %90 = vmatpush2.msra.mxu0 0.0
    %91 = vmatprep.subr.mxu0 0.0
    %92 = vmatpush2.msra.mxu0 0.0
    %93 = vmatprep.subr.mxu0 0.0
    %94 = vmatpush2.msra.mxu0 0.0
    %95 = vmatprep.mubr.f32.mxu0 0.0
    %96 = vmatmul.mubr.f32.gmra.mxu0 %v26
    %v97 = vpop.f32.mrf.mxu0
    %v98 = vadd.f32 0.0, %v97
    %v99 = vpop.f32.mrf.mxu0
    %100 = vmatprep.mubr.f32.mxu0 0.0
    %101 = vmatmul.mubr.f32.gmra.mxu0 %v29
    %v102 = vpop.f32.mrf.mxu0
    %v103 = vadd.f32 0.0, %v102
    %v104 = vpop.f32.mrf.mxu0
    %105 = vdwg.mxu0
    %v106 = vld [vmem:[%s2] sm:$0xff]
    %v107 = vld [vmem:[%s2 + $0x8] sm:$0xff]
    %v108 = vld [vmem:[%s2 + $0x10] sm:$0xff]
    %v109 = vld [vmem:[%s2 + $0x18] sm:$0xff]
    %110 = vmatprep.subr.mxu0 0.0
    %111 = vmatpush1.msra.mxu0 0.0
    %112 = vmatprep.subr.mxu0 0.0
    %113 = vmatpush1.msra.mxu0 0.0
    %114 = vmatprep.subr.mxu0 0.0
    %115 = vmatpush1.msra.mxu0 0.0
    %116 = vmatprep.subr.mxu0 0.0
    %117 = vmatpush1.msra.mxu0 0.0
    %118 = vmatprep.subr.mxu0 0.0
    %119 = vmatpush1.msra.mxu0 0.0
    %120 = vmatprep.subr.mxu0 0.0
    %121 = vmatpush1.msra.mxu0 0.0
    %122 = vmatprep.subr.mxu0 0.0
    %123 = vmatpush1.msra.mxu0 0.0
    %124 = vmatprep.subr.mxu0 0.0
    %125 = vmatpush1.msra.mxu0 0.0
    %126 = vmatprep.subr.mxu0 0.0
    %127 = vmatpush1.msra.mxu0 0.0
    %128 = vmatprep.subr.mxu0 0.0
    %129 = vmatpush1.msra.mxu0 0.0
    %130 = vmatprep.subr.mxu0 0.0
    %131 = vmatpush1.msra.mxu0 0.0
    %132 = vmatprep.subr.mxu0 0.0
    %133 = vmatpush1.msra.mxu0 0.0
    %134 = vmatprep.subr.mxu0 0.0
    %135 = vmatpush1.msra.mxu0 %v109
    %136 = vmatprep.subr.mxu0 0.0
    %137 = vmatpush1.msra.mxu0 %v108
    %138 = vmatprep.subr.mxu0 0.0
    %139 = vmatpush1.msra.mxu0 %v107
    %140 = vmatprep.subr.mxu0 0.0
    %141 = vmatpush1.msra.mxu0 %v106
    %142 = vmatprep.subr.mxu0 0.0
    %143 = vmatpush2.msra.mxu0 0.0
    %144 = vmatprep.subr.mxu0 0.0
    %145 = vmatpush2.msra.mxu0 0.0
    %146 = vmatprep.subr.mxu0 0.0
    %147 = vmatpush2.msra.mxu0 0.0
    %148 = vmatprep.subr.mxu0 0.0
    %149 = vmatpush2.msra.mxu0 0.0
    %150 = vmatprep.subr.mxu0 0.0
    %151 = vmatpush2.msra.mxu0 0.0
    %152 = vmatprep.subr.mxu0 0.0
    %153 = vmatpush2.msra.mxu0 0.0
    %154 = vmatprep.subr.mxu0 0.0
    %155 = vmatpush2.msra.mxu0 0.0
    %156 = vmatprep.subr.mxu0 0.0
    %157 = vmatpush2.msra.mxu0 0.0
    %158 = vmatprep.subr.mxu0 0.0
    %159 = vmatpush2.msra.mxu0 0.0
    %160 = vmatprep.subr.mxu0 0.0
    %161 = vmatpush2.msra.mxu0 0.0
    %162 = vmatprep.subr.mxu0 0.0
    %163 = vmatpush2.msra.mxu0 0.0
    %164 = vmatprep.subr.mxu0 0.0
    %165 = vmatpush2.msra.mxu0 0.0
    %166 = vmatprep.subr.mxu0 0.0
    %167 = vmatpush2.msra.mxu0 0.0
    %168 = vmatprep.subr.mxu0 0.0
    %169 = vmatpush2.msra.mxu0 0.0
    %170 = vmatprep.subr.mxu0 0.0
    %171 = vmatpush2.msra.mxu0 0.0
    %172 = vmatprep.subr.mxu0 0.0
    %173 = vmatpush2.msra.mxu0 0.0
    %174 = vmatprep.mubr.f32.mxu0 0.0
    %175 = vmatmul.mubr.f32.gmra.mxu0 %v26
    %v176 = vpop.f32.mrf.mxu0
    %v177 = vadd.f32 0.0, %v176
    %v178 = vpop.f32.mrf.mxu0
    %179 = vmatprep.mubr.f32.mxu0 0.0
    %180 = vmatmul.mubr.f32.gmra.mxu0 %v29
    %v181 = vpop.f32.mrf.mxu0
    %v182 = vadd.f32 0.0, %v181
    %v183 = vpop.f32.mrf.mxu0
    %184 = vdwg.mxu0
    %v185 = vxor.u32 %v98, 2147483648
    %v186 = vxor.u32 %v103, 2147483648
    %v187 = vmul.f32 %v185, 1.442695
    %v188 = vpow.pop %v187
    %v189 = vmul.f32 %v186, 1.442695
    %v190 = vpow.pop %v189
    %v191 = vadd.f32 %v188, 1.0
    %v192 = vadd.f32 %v190, 1.0
    %v193 = vrcp.pop %v191
    %v194 = vmul.f32 1.0, %v193
    %v195 = vrcp.pop %v192
    %v196 = vmul.f32 1.0, %v195
    %v197 = vmul.f32 %v98, %v194
    %v198 = vmul.f32 %v103, %v196
    %v199 = vmul.f32 %v197, %v177
    %v200 = vmul.f32 %v198, %v182
    %v201 = vld [vmem:[%s3] sm:$0xff]
    %v202 = vld [vmem:[%s3 + $0x8] sm:$0xff]
    %v203 = vld [vmem:[%s3 + $0x10] sm:$0xff]
    %v204 = vld [vmem:[%s3 + $0x18] sm:$0xff]
    %v205 = vld [vmem:[%s3 + $0x20] sm:$0xff]
    %v206 = vld [vmem:[%s3 + $0x28] sm:$0xff]
    %v207 = vld [vmem:[%s3 + $0x30] sm:$0xff]
    %v208 = vld [vmem:[%s3 + $0x38] sm:$0xff]
    %vm209 = vcmask 523264
    %v211 = vsel %vm209, %v199, 0
    %v214 = vsel %vm209, %v200, 0
    %216 = vmatprep.subr.mxu0 0.0
    %217 = vmatpush1.msra.mxu0 0.0
    %218 = vmatprep.subr.mxu0 0.0
    %219 = vmatpush1.msra.mxu0 0.0
    %220 = vmatprep.subr.mxu0 0.0
    %221 = vmatpush1.msra.mxu0 0.0
    %222 = vmatprep.subr.mxu0 0.0
    %223 = vmatpush1.msra.mxu0 0.0
    %224 = vmatprep.subr.mxu0 0.0
    %225 = vmatpush1.msra.mxu0 0.0
    %226 = vmatprep.subr.mxu0 0.0
    %227 = vmatpush1.msra.mxu0 0.0
    %228 = vmatprep.subr.mxu0 0.0
    %229 = vmatpush1.msra.mxu0 0.0
    %230 = vmatprep.subr.mxu0 0.0
    %231 = vmatpush1.msra.mxu0 0.0
    %232 = vmatprep.subr.mxu0 0.0
    %233 = vmatpush1.msra.mxu0 %v208
    %234 = vmatprep.subr.mxu0 0.0
    %235 = vmatpush1.msra.mxu0 %v207
    %236 = vmatprep.subr.mxu0 0.0
    %237 = vmatpush1.msra.mxu0 %v206
    %238 = vmatprep.subr.mxu0 0.0
    %239 = vmatpush1.msra.mxu0 %v205
    %240 = vmatprep.subr.mxu0 0.0
    %241 = vmatpush1.msra.mxu0 %v204
    %242 = vmatprep.subr.mxu0 0.0
    %243 = vmatpush1.msra.mxu0 %v203
    %244 = vmatprep.subr.mxu0 0.0
    %245 = vmatpush1.msra.mxu0 %v202
    %246 = vmatprep.subr.mxu0 0.0
    %247 = vmatpush1.msra.mxu0 %v201
    %248 = vmatprep.subr.mxu0 0.0
    %249 = vmatpush2.msra.mxu0 0.0
    %250 = vmatprep.subr.mxu0 0.0
    %251 = vmatpush2.msra.mxu0 0.0
    %252 = vmatprep.subr.mxu0 0.0
    %253 = vmatpush2.msra.mxu0 0.0
    %254 = vmatprep.subr.mxu0 0.0
    %255 = vmatpush2.msra.mxu0 0.0
    %256 = vmatprep.subr.mxu0 0.0
    %257 = vmatpush2.msra.mxu0 0.0
    %258 = vmatprep.subr.mxu0 0.0
    %259 = vmatpush2.msra.mxu0 0.0
    %260 = vmatprep.subr.mxu0 0.0
    %261 = vmatpush2.msra.mxu0 0.0
    %262 = vmatprep.subr.mxu0 0.0
    %263 = vmatpush2.msra.mxu0 0.0
    %264 = vmatprep.subr.mxu0 0.0
    %265 = vmatpush2.msra.mxu0 0.0
    %266 = vmatprep.subr.mxu0 0.0
    %267 = vmatpush2.msra.mxu0 0.0
    %268 = vmatprep.subr.mxu0 0.0
    %269 = vmatpush2.msra.mxu0 0.0
    %270 = vmatprep.subr.mxu0 0.0
    %271 = vmatpush2.msra.mxu0 0.0
    %272 = vmatprep.subr.mxu0 0.0
    %273 = vmatpush2.msra.mxu0 0.0
    %274 = vmatprep.subr.mxu0 0.0
    %275 = vmatpush2.msra.mxu0 0.0
    %276 = vmatprep.subr.mxu0 0.0
    %277 = vmatpush2.msra.mxu0 0.0
    %278 = vmatprep.subr.mxu0 0.0
    %279 = vmatpush2.msra.mxu0 0.0
    %280 = vmatprep.mubr.f32.mxu0 0.0
    %281 = vmatmul.mubr.f32.gmra.mxu0 %v211
    %v282 = vpop.f32.mrf.mxu0
    %v283 = vadd.f32 0.0, %v282
    %v284 = vpop.f32.mrf.mxu0
    %285 = vmatprep.mubr.f32.mxu0 0.0
    %286 = vmatmul.mubr.f32.gmra.mxu0 %v214
    %v287 = vpop.f32.mrf.mxu0
    %v288 = vadd.f32 0.0, %v287
    %v289 = vpop.f32.mrf.mxu0
    %290 = vdwg.mxu0
    %291 = vst.msk [vmem:[#allocation2] sm:$0xff] %vm24, %v283
    %292 = vst.msk [vmem:[#allocation2 + $0x8] sm:$0xff] %vm24, %v288
    // Predicated region
    $region18: #{tpu_custom_call.1} parent=1 // pred_check
      _
    $region19: #{tpu_custom_call.1} parent=1 // pred_check_branch
      %294 = sbr.rel (0) target = $region21
    $region20: #{tpu_custom_call.1} parent=1 // pred_region
      %s296 = ssub.s32 256, 256
      %297 = vsyncadd [#allocation3], %s296
      %s298 = sshll.u32 [#allocation2], 4
      %s299 = int_to_ptr.vmem [resolvable:$true] %s298
      %304 = dma.vmem_to_hbm [thread:$0]  %s299, 256, %s4, [#allocation3], 128, 128, 8
    $region21: #{tpu_custom_call.1} parent=1 // pred_fallthru
      _
    // Predicated region
    $region22: #{tpu_custom_call.1} parent=1 // pred_check
      _
    $region23: #{tpu_custom_call.1} parent=1 // pred_check_branch
      %306 = sbr.rel (0) target = $region25
    $region24: #{tpu_custom_call.1} parent=1 // pred_region
      %307 = dma.done [#allocation3], 256
    $region25: #{tpu_custom_call.1} parent=1 // pred_fallthru
      _
    %308 = vsyncpa [#allocation3], 1

</llo_original>
